<compile_context>
chip_gen: v6e
topology: v6e:2x2x1
jax: 0.10.0
libtpu: 0.0.40
codegen_flags: <defaults>
</compile_context>

<pallas_src>
import functools

import jax
import jax.numpy as jnp
from jax.experimental import pallas as pl
from jax.experimental.pallas import tpu as pltpu

_LANES = 128
_SUBLANES = 8


def _round_up(x, m):
    return ((x + m - 1) // m) * m


def _int_pow(x, n):
    """x**n for small non-negative integer n via trace-time exponentiation by
    squaring (VALU multiplies only, no EUP exp/log)."""
    if n == 0:
        return jnp.ones_like(x)
    result = None
    base = x
    while n:
        if n & 1:
            result = base if result is None else result * base
        n >>= 1
        if n:
            base = base * base
    return result


def _focal_partial_kernel(p_ref, t_ref, out_ref, *, alpha, gamma, binary_targets):
    eps = 1e-8
    p = p_ref[...].astype(jnp.float32)
    t = t_ref[...].astype(jnp.float32)

    # pt = probability assigned to the true class (targets are 0/1)
    pt = t * p + (1.0 - t) * (1.0 - p)

    if binary_targets:
        # For strictly 0/1 targets:
        #   -(t*log(p+eps) + (1-t)*log(1-p+eps)) == -log(pt + eps)
        # -> one transcendental per element instead of two.
        bce = -jnp.log(pt + eps)
    else:
        bce = -(t * jnp.log(p + eps) + (1.0 - t) * jnp.log(1.0 - p + eps))

    q = 1.0 - pt
    g = float(gamma)
    if g == int(g) and 0 <= int(g) <= 8:
        mod = _int_pow(q, int(g))  # e.g. gamma=2 -> q*q (no pow/exp/log)
    else:
        mod = q ** g  # general fallback (EUP exp/log path)

    focal = mod * bce
    if float(alpha) != 1.0:  # skip the multiply entirely when alpha == 1
        focal = float(alpha) * focal

    tr = focal.shape[0]
    # Fold the row tile into one vreg-shaped (8,128) partial: vreg-wise VALU
    # adds only; the full cross-lane/sublane reduce is deferred to the wrapper.
    out_ref[...] = focal.reshape(tr // _SUBLANES, _SUBLANES, _LANES).sum(axis=0)


def focal_loss(preds, targets, alpha=1.0, gamma=2.0, reduction="mean",
               block_rows=1024, binary_targets=True):
    """preds: [N, C] in (0,1); targets: [N, C] of 0/1 values.

    Matches FocalLoss.forward with reduction in {'mean','sum'}. With
    binary_targets=True the single-log BCE form is used (exactly equivalent
    for 0/1 targets); pass binary_targets=False for soft/fractional targets.
    """
    assert preds.shape == targets.shape
    if reduction not in ("mean", "sum"):
        # TODO(synk): reduction='none' (elementwise output) not implemented in this reduction kernel.
        raise NotImplementedError("kernel wrapper supports reduction='mean' or 'sum'")

    total = int(preds.size)
    rows = -(-total // _LANES)

    # Tile: multiple of 8 sublanes, capped at block_rows; pad rows up to a
    # multiple of the tile so the grid is exact (padding contributes 0).
    tile_rows = _round_up(min(int(block_rows), _round_up(max(rows, 1), _SUBLANES)),
                          _SUBLANES)
    padded_rows = _round_up(rows, tile_rows)
    padded_total = padded_rows * _LANES

    p_flat = preds.reshape(-1)
    t_flat = targets.reshape(-1)
    if padded_total != total:
        # Pad with (p=1, t=1): pt == 1 exactly -> (1-pt)**gamma == 0 and
        # bce == -log(1 + eps) == 0 in f32, so padded elements add exactly 0.
        pad = padded_total - total
        p_flat = jnp.pad(p_flat, (0, pad), constant_values=1.0)
        t_flat = jnp.pad(t_flat, (0, pad), constant_values=1.0)
    p2 = p_flat.reshape(padded_rows, _LANES)
    t2 = t_flat.reshape(padded_rows, _LANES)

    grid = padded_rows // tile_rows
    kernel = functools.partial(
        _focal_partial_kernel,
        alpha=float(alpha),
        gamma=float(gamma),
        binary_targets=bool(binary_targets),
    )

    partials = pl.pallas_call(
        kernel,
        out_shape=jax.ShapeDtypeStruct((grid * _SUBLANES, _LANES), jnp.float32),
        grid_spec=pltpu.PrefetchScalarGridSpec(
            num_scalar_prefetch=0,
            grid=(grid,),
            in_specs=[
                pl.BlockSpec((tile_rows, _LANES), lambda i: (i, 0)),
                pl.BlockSpec((tile_rows, _LANES), lambda i: (i, 0)),
            ],
            out_specs=pl.BlockSpec((_SUBLANES, _LANES), lambda i: (i, 0)),
        ),
        compiler_params=pltpu.CompilerParams(
            dimension_semantics=("parallel",),   # independent blocks -> both TCs on v7x
            vmem_limit_bytes=32 * 1024 * 1024,   # safe on v5e/v6e/v7x with these tiles
        ),
    )(p2, t2)

    total_sum = jnp.sum(partials)
    if reduction == "mean":
        return total_sum / float(total)
    return total_sum


def focal_loss_ref(preds, targets, alpha=1.0, gamma=2.0):
    eps = 1e-8
    p = preds.astype(jnp.float32)
    t = targets.astype(jnp.float32)
    bce = -(t * jnp.log(p + eps) + (1.0 - t) * jnp.log(1.0 - p + eps))
    pt = t * p + (1.0 - t) * (1.0 - p)
    focal = alpha * (1.0 - pt) ** gamma * bce
    return focal.mean()


if __name__ == "__main__":
    key = jax.random.PRNGKey(0)
    k1, k2, k3, k4 = jax.random.split(key, 4)

    # Case 1: total elements already a multiple of 128 (no padding path).
    N, C = 16, 32
    preds = jax.nn.sigmoid(jax.random.normal(k1, (N, C), dtype=jnp.float32))
    targets = jax.random.bernoulli(k2, p=0.3, shape=(N, C)).astype(jnp.float32)

    loss = jax.block_until_ready(focal_loss(preds, targets))
    ref = focal_loss_ref(preds, targets)
    assert jnp.allclose(loss, ref, rtol=1e-5, atol=1e-6), (loss, ref)

    # Case 2: ragged total -> exercises the lane padding path.
    N2, C2 = 10, 7
    preds2 = jax.nn.sigmoid(jax.random.normal(k3, (N2, C2), dtype=jnp.float32))
    targets2 = jax.random.bernoulli(k4, p=0.3, shape=(N2, C2)).astype(jnp.float32)

    loss2 = jax.block_until_ready(focal_loss(preds2, targets2))
    ref2 = focal_loss_ref(preds2, targets2)
    assert jnp.allclose(loss2, ref2, rtol=1e-5, atol=1e-6), (loss2, ref2)

    print("KERNEL_OK")
</pallas_src>

<mosaic_0001>
module attributes {stable_mosaic.version = 11 : i64} {
  func.func @_focal_partial_kernel(%arg0: i32, %arg1: memref<8x128xf32, #tpu.memory_space<vmem>>, %arg2: memref<8x128xf32, #tpu.memory_space<vmem>>, %arg3: memref<8x128xf32, #tpu.memory_space<vmem>>) attributes {dimension_semantics = [#tpu.dimension_semantics<parallel>], iteration_bounds = array<i64: 1>, scalar_prefetch = 0 : i64, scratch_operands = 0 : i64, tpu.core_type = #tpu.core_type<tc>, window_params = [{transform_indices = @transform_0, window_bounds = array<i64: 8, 128>}, {transform_indices = @transform_1, window_bounds = array<i64: 8, 128>}, {transform_indices = @transform_2, window_bounds = array<i64: 8, 128>}]} {
    %c0 = arith.constant 0 : index
    %c0_0 = arith.constant 0 : index
    %0 = vector.load %arg1[%c0, %c0_0] : memref<8x128xf32, #tpu.memory_space<vmem>>, vector<8x128xf32>
    %c0_1 = arith.constant 0 : index
    %c0_2 = arith.constant 0 : index
    %1 = vector.load %arg2[%c0_1, %c0_2] : memref<8x128xf32, #tpu.memory_space<vmem>>, vector<8x128xf32>
    %2 = arith.mulf %1, %0 : vector<8x128xf32>
    %cst = arith.constant 1.000000e+00 : f32
    %3 = vector.broadcast %cst : f32 to vector<8x128xf32>
    %4 = arith.subf %3, %1 : vector<8x128xf32>
    %cst_3 = arith.constant 1.000000e+00 : f32
    %5 = vector.broadcast %cst_3 : f32 to vector<8x128xf32>
    %6 = arith.subf %5, %0 : vector<8x128xf32>
    %7 = arith.mulf %4, %6 : vector<8x128xf32>
    %8 = arith.addf %2, %7 : vector<8x128xf32>
    %cst_4 = arith.constant 9.99999993E-9 : f32
    %9 = vector.broadcast %cst_4 : f32 to vector<8x128xf32>
    %10 = arith.addf %8, %9 : vector<8x128xf32>
    %11 = math.log %10 : vector<8x128xf32>
    %cst_5 = arith.constant 0.000000e+00 : f32
    %12 = vector.broadcast %cst_5 : f32 to vector<8x128xf32>
    %13 = arith.subf %12, %11 : vector<8x128xf32>
    %cst_6 = arith.constant 1.000000e+00 : f32
    %14 = vector.broadcast %cst_6 : f32 to vector<8x128xf32>
    %15 = arith.subf %14, %8 : vector<8x128xf32>
    %16 = arith.mulf %15, %15 : vector<8x128xf32>
    %17 = arith.mulf %16, %13 : vector<8x128xf32>
    %18 = vector.shape_cast %17 : vector<8x128xf32> to vector<1x8x128xf32>
    %cst_7 = arith.constant dense<0.000000e+00> : vector<8x128xf32>
    %19 = vector.multi_reduction <add>, %18, %cst_7 [0] : vector<1x8x128xf32> to vector<8x128xf32>
    %c0_8 = arith.constant 0 : index
    %c0_9 = arith.constant 0 : index
    %20 = vector.load %arg3[%c0_8, %c0_9] : memref<8x128xf32, #tpu.memory_space<vmem>>, vector<8x128xf32>
    tpu.vector_store %arg3[%c0_8, %c0_9], %19 {strides = array<i32>} : memref<8x128xf32, #tpu.memory_space<vmem>>, vector<8x128xf32>,
    return
  }
  func.func @transform_0(%arg0: i32) -> (i32, i32) {
    %c0_i32 = arith.constant 0 : i32
    %c0_i32_0 = arith.constant 0 : i32
    return %arg0, %c0_i32 : i32, i32
  }
  func.func @transform_1(%arg0: i32) -> (i32, i32) {
    %c0_i32 = arith.constant 0 : i32
    %c0_i32_0 = arith.constant 0 : i32
    return %arg0, %c0_i32 : i32, i32
  }
  func.func @transform_2(%arg0: i32) -> (i32, i32) {
    %c0_i32 = arith.constant 0 : i32
    %c0_i32_0 = arith.constant 0 : i32
    return %arg0, %c0_i32 : i32, i32
  }
}

</mosaic_0001>

<llo_original>
// kernel: tpu_custom_call.1
$region0: #{tpu_custom_call.1}
  #allocation0 [shape = 'u32[]', space=smem, size = 0x4, offset = 0x4, fixed_abs, tag = 'smem constant byte address 0x4 - core index']
  #allocation1 [shape = 'u32[144,128]{1,0:T(1,128)}', space=vmem, size = 0x12000, scoped, tag = 'internal scratch']
  %s0 = inlined_call_operand.hbm [shape: f32[8,128], index: 0, kind: input, shape index: {}]
  %s1 = inlined_call_operand.hbm [shape: f32[8,128], index: 1, kind: input, shape index: {}]
  %s2 = inlined_call_operand.hbm [shape: f32[8,128], index: 2, kind: output, shape index: {}]
  %s3 = sld [smem:[#allocation0]]
  $region26: #{tpu_custom_call.1} parent=0
    _
  %s5 = ssub.s32 1, %s3
  %s6 = scalar_select 0, %s5, %s3
  $region1: #{tpu_custom_call.1} parent=0
    #allocation2 [shape = 'u8[4096]{0}', space=vmem, size = 0x1000, scoped, tag = 'input window, operand 0, single buffered']
    #allocation3 [shape = 's32[1]{0}', space=sflag, size = 0x4, scoped, tag = 'scoped memory for tpu_custom_call.1']
    #allocation4 [shape = 's32[1]{0}', space=sflag, size = 0x4, scoped, tag = 'scoped memory for tpu_custom_call.1']
    #allocation5 [shape = 'u8[4096]{0}', space=vmem, size = 0x1000, scoped, tag = 'input window, operand 1, single buffered']
    #allocation6 [shape = 's32[1]{0}', space=sflag, size = 0x4, scoped, tag = 'scoped memory for tpu_custom_call.1']
    #allocation7 [shape = 'u8[4096]{0}', space=vmem, size = 0x1000, scoped, tag = 'output window, operand 0, single buffered']
    %7 = vsyncpa [#allocation3], 0
    %8 = vsyncpa [#allocation6], 0
    %9 = vsyncpa [#allocation4], 0
    // Predicated region
    $region2: #{tpu_custom_call.1} parent=1 // pred_check
      _
    $region3: #{tpu_custom_call.1} parent=1 // pred_check_branch
      %11 = sbr.rel (0) target = $region5
    $region4: #{tpu_custom_call.1} parent=1 // pred_region
      %s13 = ssub.s32 128, 128
      %14 = vsyncadd [#allocation3], %s13
      %s16 = sshll.u32 [#allocation2], 4
      %s17 = int_to_ptr.vmem [resolvable:$true] %s16
      %19 = dma.hbm_to_vmem [thread:$0]  %s0, 128, %s17, [#allocation3]
    $region5: #{tpu_custom_call.1} parent=1 // pred_fallthru
      _
    // Predicated region
    $region6: #{tpu_custom_call.1} parent=1 // pred_check
      _
    $region7: #{tpu_custom_call.1} parent=1 // pred_check_branch
      %21 = sbr.rel (0) target = $region9
    $region8: #{tpu_custom_call.1} parent=1 // pred_region
      %s23 = ssub.s32 128, 128
      %24 = vsyncadd [#allocation6], %s23
      %s26 = sshll.u32 [#allocation5], 4
      %s27 = int_to_ptr.vmem [resolvable:$true] %s26
      %29 = dma.hbm_to_vmem [thread:$0]  %s1, 128, %s27, [#allocation6]
    $region9: #{tpu_custom_call.1} parent=1 // pred_fallthru
      _
    // Predicated region
    $region10: #{tpu_custom_call.1} parent=1 // pred_check
      _
    $region11: #{tpu_custom_call.1} parent=1 // pred_check_branch
      %31 = sbr.rel (0) target = $region13
    $region12: #{tpu_custom_call.1} parent=1 // pred_region
      %32 = dma.done [#allocation3], 128
    $region13: #{tpu_custom_call.1} parent=1 // pred_fallthru
      _
    // Predicated region
    $region14: #{tpu_custom_call.1} parent=1 // pred_check
      _
    $region15: #{tpu_custom_call.1} parent=1 // pred_check_branch
      %34 = sbr.rel (0) target = $region17
    $region16: #{tpu_custom_call.1} parent=1 // pred_region
      %35 = dma.done [#allocation6], 128
    $region17: #{tpu_custom_call.1} parent=1 // pred_fallthru
      _
    %v36 = vld [vmem:[#allocation2] sm:$0xff]
    %v37 = vld [vmem:[#allocation5] sm:$0xff]
    %v38 = vmul.f32 %v37, %v36
    %v39 = vsub.f32 1.0, %v37
    %v40 = vsub.f32 1.0, %v36
    %v41 = vmul.f32 %v39, %v40
    %v42 = vadd.f32 %v38, %v41
    %v43 = vadd.f32 %v42, 1e-08
    %v44 = vlog2.pop %v43
    %v45 = vmul.f32 %v44, 0.6931472
    %v46 = vsub.f32 0.0, %v45
    %v47 = vsub.f32 1.0, %v42
    %v48 = vmul.f32 %v47, %v47
    %v49 = vmul.f32 %v48, %v46
    %v50 = vadd.f32 %v49, 0.0
    %51 = vst [vmem:[#allocation7] sm:$0xff] %v50
    // Predicated region
    $region18: #{tpu_custom_call.1} parent=1 // pred_check
      _
    $region19: #{tpu_custom_call.1} parent=1 // pred_check_branch
      %53 = sbr.rel (0) target = $region21
    $region20: #{tpu_custom_call.1} parent=1 // pred_region
      %s55 = ssub.s32 128, 128
      %56 = vsyncadd [#allocation4], %s55
      %s58 = sshll.u32 [#allocation7], 4
      %s59 = int_to_ptr.vmem [resolvable:$true] %s58
      %61 = dma.vmem_to_hbm [thread:$0]  %s59, 128, %s2, [#allocation4]
    $region21: #{tpu_custom_call.1} parent=1 // pred_fallthru
      _
    // Predicated region
    $region22: #{tpu_custom_call.1} parent=1 // pred_check
      _
    $region23: #{tpu_custom_call.1} parent=1 // pred_check_branch
      %63 = sbr.rel (0) target = $region25
    $region24: #{tpu_custom_call.1} parent=1 // pred_region
      %64 = dma.done [#allocation4], 128
    $region25: #{tpu_custom_call.1} parent=1 // pred_fallthru
      _
    %65 = vsyncpa [#allocation3], 1
    %66 = vsyncpa [#allocation6], 1
    %67 = vsyncpa [#allocation4], 1

</llo_original>
